<compile_context>
chip_gen: v7x
topology: tpu7x:2x2x1
jax: 0.10.0
libtpu: 0.0.40
codegen_flags: <defaults>
</compile_context>

<pallas_src>
import functools

import jax
import jax.numpy as jnp
from jax import lax
from jax.experimental import pallas as pl
from jax.experimental.pallas import tpu as pltpu


_SUBLANE_F32 = 8  # f32 sublane height; the pooling reshape is free only if L % 8 == 0


# --------------------------- kernel bodies ----------------------------------

def _encode_block(ids, fused, bias, n_sent, seq_len):
    """SentenceEncoder for one sentence group, entirely in-VMEM.

    ids  : (N*L, 1) int32 token ids (sentence-major)
    fused: (V, H)   pre-folded E @ W^T table (row 0 == 0 for padding_idx=0)
    bias : (1, H)   Linear bias (added after the max; exact, constant over L)
    returns (N, H) pooled sentence vectors (f32).
    """
    nl = n_sent * seq_len
    v, h = fused.shape
    # Embedding gather as an exact one-hot MXU matmul against the fused table.
    vocab_iota = lax.broadcasted_iota(jnp.int32, (nl, v), 1)          # (N*L, V)
    one_hot = (ids == vocab_iota).astype(jnp.float32)                 # exact 0/1
    y = jnp.dot(one_hot, fused, preferred_element_type=jnp.float32)   # (N*L, H)
    # seq_len % 8 == 0 (asserted in wrappers) -> free re-view, no VMEM re-tile.
    pooled = jnp.max(y.reshape(n_sent, seq_len, h), axis=1)           # (N, H)
    return pooled + bias


def _encoder_kernel(ids_ref, fused_ref, b_ref, o_ref, *, n_sent, seq_len):
    o_ref[...] = _encode_block(ids_ref[...], fused_ref[...], b_ref[...],
                               n_sent, seq_len).astype(o_ref.dtype)


def _triplet_kernel(ids1_ref, ids2_ref, ids3_ref, fused_ref, b_ref, loss_ref,
                    *, batch, seq_len, margin):
    fused = fused_ref[...]
    bias = b_ref[...]
    # Three independent small matmuls pipeline back-to-back on the MXU and keep
    # every pooling reshape tile-aligned (no unaligned sublane slicing).
    v1 = _encode_block(ids1_ref[...], fused, bias, batch, seq_len)
    v2 = _encode_block(ids2_ref[...], fused, bias, batch, seq_len)
    v3 = _encode_block(ids3_ref[...], fused, bias, batch, seq_len)

    def _normalize(x):  # torch.nn.functional.normalize(dim=-1), eps=1e-12
        norm = jnp.sqrt(jnp.sum(x * x, axis=-1, keepdims=True))
        return x / jnp.maximum(norm, 1e-12)

    n1, n2, n3 = _normalize(v1), _normalize(v2), _normalize(v3)
    ap = 1.0 - jnp.sum(n1 * n2, axis=-1, keepdims=True)               # (B, 1)
    an = 1.0 - jnp.sum(n1 * n3, axis=-1, keepdims=True)               # (B, 1)
    diff = ap - an + margin
    pos = (diff > 0.0).astype(jnp.float32)
    # torch.mean(diff[diff > 0]) with static shapes (NaN if no positives, like torch).
    loss_ref[0, 0] = jnp.sum(diff * pos) / jnp.sum(pos)


# --------------------------- wrappers ----------------------------------------

def prepare_params(emb_table, w, b):
    """Fold Embedding table and Linear weight into one (V, H) table (param-prep).

    fused = E @ W^T.  Exact for the one-hot gather (pure row selection) and row 0
    stays exactly zero, so padding tokens still embed to 0 like torch.
    """
    emb = emb_table.astype(jnp.float32)
    w32 = w.astype(jnp.float32)
    fused = jnp.dot(emb, w32.T)                      # (V, H)
    bias = b.astype(jnp.float32).reshape(1, -1)      # (1, H)
    return fused, bias


def _check_seq_len(l):
    if l % _SUBLANE_F32 != 0:
        # TODO(synk): support L not multiple of 8 by padding ids and masking the
        # padded positions to -inf before the max (a zero-pad would change the max).
        raise ValueError(f"seq_len={l} must be a multiple of {_SUBLANE_F32} (f32 sublane)")


def encode_sentences(x_ids, fused_table, bias):
    """SentenceEncoder.forward: (N, L) int ids -> (N, H) pooled vectors."""
    n, l = x_ids.shape
    _, h = fused_table.shape
    _check_seq_len(l)
    ids_flat = x_ids.astype(jnp.int32).reshape(n * l, 1)
    kernel = functools.partial(_encoder_kernel, n_sent=n, seq_len=l)
    return pl.pallas_call(
        kernel,
        out_shape=jax.ShapeDtypeStruct((n, h), jnp.float32),
        in_specs=[pl.BlockSpec(memory_space=pltpu.MemorySpace.VMEM)] * 3,
        out_specs=pl.BlockSpec(memory_space=pltpu.MemorySpace.VMEM),
    )(ids_flat, fused_table, bias)


def triplet_loss(s1, s2, s3, fused_table, bias, margin=0.1):
    """Full Siamese triplet forward as ONE fused pallas_call -> scalar loss."""
    bsz, l = s1.shape
    _check_seq_len(l)
    ids = [s.astype(jnp.int32).reshape(bsz * l, 1) for s in (s1, s2, s3)]
    kernel = functools.partial(_triplet_kernel, batch=bsz, seq_len=l,
                               margin=float(margin))
    out = pl.pallas_call(
        kernel,
        out_shape=jax.ShapeDtypeStruct((1, 1), jnp.float32),
        in_specs=[pl.BlockSpec(memory_space=pltpu.MemorySpace.VMEM)] * 5,
        out_specs=pl.BlockSpec(memory_space=pltpu.MemorySpace.SMEM),
    )(ids[0], ids[1], ids[2], fused_table, bias)
    return out[0, 0]


def siamese_forward(prepared_params, sentence1, sentence2=None, sentence3=None,
                    margin=None):
    fused_table, bias = prepared_params
    if sentence2 is not None and sentence3 is not None:
        m = 0.1 if margin is None else margin
        return triplet_loss(sentence1, sentence2, sentence3, fused_table, bias, m)
    return encode_sentences(sentence1, fused_table, bias)


# --------------------------- pure-JAX reference ------------------------------

def _encoder_reference(x_ids, emb_table, w, b):
    emb = jnp.take(emb_table, x_ids, axis=0)
    y = jnp.einsum("nlh,oh->nlo", emb, w) + b
    return jnp.max(y, axis=1)


def _l2_normalize_ref(x, eps=1e-12):
    return x / jnp.maximum(jnp.linalg.norm(x, axis=-1, keepdims=True), eps)


def _cosine_triplet_loss_ref(a, p, n, margin=0.1):
    ap = 1.0 - jnp.sum(_l2_normalize_ref(a) * _l2_normalize_ref(p), axis=-1)
    an = 1.0 - jnp.sum(_l2_normalize_ref(a) * _l2_normalize_ref(n), axis=-1)
    diff = ap - an + margin
    pos = diff > 0
    return jnp.sum(jnp.where(pos, diff, 0.0)) / jnp.sum(pos).astype(jnp.float32)


def _siamese_reference(raw_params, s1, s2=None, s3=None):
    emb_table, w, b = raw_params
    if s2 is not None and s3 is not None:
        v1 = _encoder_reference(s1, emb_table, w, b)
        v2 = _encoder_reference(s2, emb_table, w, b)
        v3 = _encoder_reference(s3, emb_table, w, b)
        return _cosine_triplet_loss_ref(v1, v2, v3)
    return _encoder_reference(s1, emb_table, w, b)


# --------------------------- demo / self-check -------------------------------

if __name__ == "__main__":
    # config: hidden_size=32, vocab_size=30 (+1 for padding), max_length=8, batch=2
    hidden_size = 32
    vocab_size = 30 + 1
    max_length = 8
    batch = 2

    key = jax.random.PRNGKey(0)
    k_emb, k_w, k_b, k1, k2, k3 = jax.random.split(key, 6)

    # Deterministic synthetic parameters mirroring the module's shapes.
    emb_table = jax.random.normal(k_emb, (vocab_size, hidden_size), jnp.float32)
    emb_table = emb_table.at[0].set(0.0)                     # padding_idx=0
    bound = 1.0 / jnp.sqrt(hidden_size)
    w = jax.random.uniform(k_w, (hidden_size, hidden_size), jnp.float32,
                           -bound, bound)                    # torch Linear weight (out, in)
    b = jax.random.uniform(k_b, (hidden_size,), jnp.float32, -bound, bound)
    raw_params = (emb_table, w, b)
    prepared = prepare_params(emb_table, w, b)               # fold E @ W^T once

    # Integer token ids with some padding (zeros).
    s1 = jax.random.randint(k1, (batch, max_length), 0, vocab_size, jnp.int32)
    s2 = jax.random.randint(k2, (batch, max_length), 0, vocab_size, jnp.int32)
    s3 = jax.random.randint(k3, (batch, max_length), 0, vocab_size, jnp.int32)

    encode_jit = jax.jit(lambda p, a: siamese_forward(p, a))
    triplet_jit = jax.jit(lambda p, a, b_, c: siamese_forward(p, a, b_, c))

    # Single-sentence path: SentenceEncoder output.
    vec = jax.block_until_ready(encode_jit(prepared, s1))
    assert vec.shape == (batch, hidden_size)
    assert jnp.allclose(vec, _siamese_reference(raw_params, s1),
                        atol=1e-4, rtol=1e-4), "encoder mismatch vs reference"

    # Triplet path: encoders + cosine-triplet head fully fused in one kernel call.
    loss = jax.block_until_ready(triplet_jit(prepared, s1, s2, s3))
    ref_loss = _siamese_reference(raw_params, s1, s2, s3)
    assert loss.shape == ()
    assert jnp.allclose(loss, ref_loss, atol=1e-4, rtol=1e-4, equal_nan=True), \
        "triplet loss mismatch vs reference"

    print("KERNEL_OK")
</pallas_src>

<mosaic_0001>
module attributes {stable_mosaic.version = 11 : i64} {
  func.func @_encoder_kernel(%arg0: memref<16x1xi32, #tpu.memory_space<vmem>>, %arg1: memref<31x32xf32, #tpu.memory_space<vmem>>, %arg2: memref<1x32xf32, #tpu.memory_space<vmem>>, %arg3: memref<2x32xf32, #tpu.memory_space<vmem>>) attributes {dimension_semantics = [], scalar_prefetch = 0 : i64, scratch_operands = 0 : i64, tpu.core_type = #tpu.core_type<tc>} {
    %c0 = arith.constant 0 : index
    %c0_0 = arith.constant 0 : index
    %0 = vector.load %arg0[%c0, %c0_0] : memref<16x1xi32, #tpu.memory_space<vmem>>, vector<16x1xi32>
    %c0_1 = arith.constant 0 : index
    %c0_2 = arith.constant 0 : index
    %1 = vector.load %arg1[%c0_1, %c0_2] : memref<31x32xf32, #tpu.memory_space<vmem>>, vector<31x32xf32>
    %c0_3 = arith.constant 0 : index
    %c0_4 = arith.constant 0 : index
    %2 = vector.load %arg2[%c0_3, %c0_4] : memref<1x32xf32, #tpu.memory_space<vmem>>, vector<1x32xf32>
    %3 = tpu.iota {dimensions = array<i32: 1>} : vector<16x31xi32>
    %4 = vector.broadcast %0 : vector<16x1xi32> to vector<16x31xi32>
    %5 = arith.cmpi eq, %4, %3 : vector<16x31xi32>
    %6 = arith.extui %5 : vector<16x31xi1> to vector<16x31xi32>
    %7 = arith.sitofp %6 : vector<16x31xi32> to vector<16x31xf32>
    %cst = arith.constant dense<0.000000e+00> : vector<16x32xf32>
    %8 = tpu.matmul %7, %1, %cst {dimension_numbers = #tpu.dot_dimension_numbers<[1], [0], [0], [1], [0, 0, 1, 1], [], []>} : vector<16x31xf32>, vector<31x32xf32>, vector<16x32xf32> -> vector<16x32xf32>
    %9 = vector.shape_cast %8 : vector<16x32xf32> to vector<2x8x32xf32>
    %cst_5 = arith.constant dense<0xFF800000> : vector<2x32xf32>
    %10 = vector.multi_reduction <maximumf>, %9, %cst_5 [1] : vector<2x8x32xf32> to vector<2x32xf32>
    %11 = vector.broadcast %2 : vector<1x32xf32> to vector<2x32xf32>
    %12 = arith.addf %10, %11 : vector<2x32xf32>
    %c0_6 = arith.constant 0 : index
    %c0_7 = arith.constant 0 : index
    %13 = vector.load %arg3[%c0_6, %c0_7] : memref<2x32xf32, #tpu.memory_space<vmem>>, vector<2x32xf32>
    tpu.vector_store %arg3[%c0_6, %c0_7], %12 {strides = array<i32>} : memref<2x32xf32, #tpu.memory_space<vmem>>, vector<2x32xf32>,
    return
  }
}

</mosaic_0001>

<llo_original>
// kernel: _lambda_.1
$region0: #{_lambda_.1}
  #allocation0 [shape = 'u32[]', space=smem, size = 0x4, offset = 0x4, fixed_abs, tag = 'smem constant byte address 0x4 - core index']
  #allocation1 [shape = 'u32[144,128]{1,0:T(1,128)}', space=vmem, size = 0x12000, scoped, tag = 'internal scratch']
  %s0 = inlined_call_operand.vmem [shape: s32[16,1], index: 0, kind: input, shape index: {}]
  %s1 = inlined_call_operand.hbm [shape: f32[31,32], index: 1, kind: input, shape index: {}]
  %s2 = inlined_call_operand.vmem [shape: f32[1,32], index: 2, kind: input, shape index: {}]
  %s3 = inlined_call_operand.hbm [shape: f32[2,32], index: 3, kind: output, shape index: {}]
  %s4 = sld [smem:[#allocation0]]
  $region26: #{_lambda_.1} parent=0
    _
  %s6 = ssub.s32 1, %s4
  %s7 = scalar_select 0, %s6, %s4
  $region1: #{_lambda_.1} parent=0
    #allocation2 [shape = 'u8[16384]{0}', space=vmem, size = 0x4000, scoped, tag = 'input window, operand 1, single buffered']
    #allocation3 [shape = 's32[1]{0}', space=sflag, size = 0x4, scoped, tag = 'scoped memory for _lambda_.1']
    #allocation4 [shape = 's32[1]{0}', space=sflag, size = 0x4, scoped, tag = 'scoped memory for _lambda_.1']
    #allocation5 [shape = 'u8[1024]{0}', space=vmem, size = 0x400, scoped, tag = 'output window, operand 0, single buffered']
    %8 = vsyncpa [#allocation3], 0
    %9 = vsyncpa [#allocation4], 0
    // Predicated region
    $region2: #{_lambda_.1} parent=1 // pred_check
      _
    $region3: #{_lambda_.1} parent=1 // pred_check_branch
      %11 = sbr.rel (0) target = $region5
    $region4: #{_lambda_.1} parent=1 // pred_region
      _
    $region5: #{_lambda_.1} parent=1 // pred_fallthru
      _
    // Predicated region
    $region6: #{_lambda_.1} parent=1 // pred_check
      _
    $region7: #{_lambda_.1} parent=1 // pred_check_branch
      %13 = sbr.rel (0) target = $region9
    $region8: #{_lambda_.1} parent=1 // pred_region
      %s15 = ssub.s32 512, 512
      %16 = vsyncadd [#allocation3], %s15
      %s17 = sshll.u32 [#allocation2], 4
      %s18 = int_to_ptr.vmem [resolvable:$true] %s17
      %23 = dma.hbm_to_vmem [thread:$0]  %s1, 512, %s18, [#allocation3], 128, 128, 8
    $region9: #{_lambda_.1} parent=1 // pred_fallthru
      _
    // Predicated region
    $region10: #{_lambda_.1} parent=1 // pred_check
      _
    $region11: #{_lambda_.1} parent=1 // pred_check_branch
      %25 = sbr.rel (0) target = $region13
    $region12: #{_lambda_.1} parent=1 // pred_region
      _
    $region13: #{_lambda_.1} parent=1 // pred_fallthru
      _
    // Predicated region
    $region14: #{_lambda_.1} parent=1 // pred_check
      _
    $region15: #{_lambda_.1} parent=1 // pred_check_branch
      %27 = sbr.rel (0) target = $region17
    $region16: #{_lambda_.1} parent=1 // pred_region
      %28 = dma.done [#allocation3], 512
    $region17: #{_lambda_.1} parent=1 // pred_fallthru
      _
    %v29 = vld [vmem:[%s0] sm:$0xff]
    %v30 = vld [vmem:[%s0 + $0x8] sm:$0xff]
    %v31 = vld [vmem:[#allocation2] sm:$0xff]
    %v32 = vld [vmem:[#allocation2 + $0x8] sm:$0xff]
    %v33 = vld [vmem:[#allocation2 + $0x10] sm:$0xff]
    %v34 = vld [vmem:[#allocation2 + $0x18] sm:$0x7f]
    %v35 = vld [vmem:[%s2] sm:$0x1]
    %v36 = vlaneseq
    %v37 = vand.u32 %v36, 127
    %38 = vset.pattern.permute.xlu0 0
    %39 = vperm.xlu0 %38, %v29
    %v40 = vpop.permute.xlu0 %39
    %41 = vset.pattern.permute.xlu0 0
    %42 = vperm.xlu0 %41, %v30
    %v43 = vpop.permute.xlu0 %42
    %vm44 = vcmp.eq.s32.totalorder %v40, %v37
    %vm45 = vcmp.eq.s32.totalorder %v43, %v37
    %v46 = vsel %vm44, 1, 0
    %v47 = vsel %vm45, 1, 0
    %v48 = vcvt.s32.f32 %v46
    %v49 = vcvt.s32.f32 %v47
    %vm50 = vcmask 252928
    %v52 = vsel %vm50, %v48, 0
    %v55 = vsel %vm50, %v49, 0
    %vm57 = vcmask 1046528
    %v59 = vsel %vm57, %v34, 0
    %61 = vmatprep.subr.mxu0 0.0
    %62 = vmatpush1.msra.mxu0 %v31
    %63 = vmatprep.subr.mxu0 0.0
    %64 = vmatpush1.msra.mxu0 %v32
    %65 = vmatprep.subr.mxu0 0.0
    %66 = vmatpush1.msra.mxu0 %v33
    %67 = vmatprep.subr.mxu0 0.0
    %68 = vmatpush1.msra.mxu0 %v59
    %69 = vmatprep.subr.mxu0 0.0
    %70 = vmatpush1.msra.mxu0 0.0
    %71 = vmatprep.subr.mxu0 0.0
    %72 = vmatpush1.msra.mxu0 0.0
    %73 = vmatprep.subr.mxu0 0.0
    %74 = vmatpush1.msra.mxu0 0.0
    %75 = vmatprep.subr.mxu0 0.0
    %76 = vmatpush1.msra.mxu0 0.0
    %77 = vmatprep.subr.mxu0 0.0
    %78 = vmatpush1.msra.mxu0 0.0
    %79 = vmatprep.subr.mxu0 0.0
    %80 = vmatpush1.msra.mxu0 0.0
    %81 = vmatprep.subr.mxu0 0.0
    %82 = vmatpush1.msra.mxu0 0.0
    %83 = vmatprep.subr.mxu0 0.0
    %84 = vmatpush1.msra.mxu0 0.0
    %85 = vmatprep.subr.mxu0 0.0
    %86 = vmatpush1.msra.mxu0 0.0
    %87 = vmatprep.subr.mxu0 0.0
    %88 = vmatpush1.msra.mxu0 0.0
    %89 = vmatprep.subr.mxu0 0.0
    %90 = vmatpush1.msra.mxu0 0.0
    %91 = vmatprep.subr.mxu0 0.0
    %92 = vmatpush1.msra.mxu0 0.0
    %93 = vmatprep.subr.mxu0 0.0
    %94 = vmatpush1.msra.mxu0 0.0
    %95 = vmatprep.subr.mxu0 0.0
    %96 = vmatpush1.msra.mxu0 0.0
    %97 = vmatprep.subr.mxu0 0.0
    %98 = vmatpush1.msra.mxu0 0.0
    %99 = vmatprep.subr.mxu0 0.0
    %100 = vmatpush1.msra.mxu0 0.0
    %101 = vmatprep.subr.mxu0 0.0
    %102 = vmatpush1.msra.mxu0 0.0
    %103 = vmatprep.subr.mxu0 0.0
    %104 = vmatpush1.msra.mxu0 0.0
    %105 = vmatprep.subr.mxu0 0.0
    %106 = vmatpush1.msra.mxu0 0.0
    %107 = vmatprep.subr.mxu0 0.0
    %108 = vmatpush1.msra.mxu0 0.0
    %109 = vmatprep.subr.mxu0 0.0
    %110 = vmatpush1.msra.mxu0 0.0
    %111 = vmatprep.subr.mxu0 0.0
    %112 = vmatpush1.msra.mxu0 0.0
    %113 = vmatprep.subr.mxu0 0.0
    %114 = vmatpush1.msra.mxu0 0.0
    %115 = vmatprep.subr.mxu0 0.0
    %116 = vmatpush1.msra.mxu0 0.0
    %117 = vmatprep.subr.mxu0 0.0
    %118 = vmatpush1.msra.mxu0 0.0
    %119 = vmatprep.subr.mxu0 0.0
    %120 = vmatpush1.msra.mxu0 0.0
    %121 = vmatprep.subr.mxu0 0.0
    %122 = vmatpush1.msra.mxu0 0.0
    %123 = vmatprep.subr.mxu0 0.0
    %124 = vmatpush1.msra.mxu0 0.0
    %125 = vmatprep.mubr.f32.mxu0 0.0
    %126 = vmatmul.mubr.f32.gmra.mrb[0].mxu0 %v52
    %v127 = vpop.f32.mrb[0].mxu0
    %v128 = vadd.f32 0.0, %v127
    %v129 = vpop.f32.mrb[0].mxu0
    %130 = vmatprep.mubr.f32.mxu0 0.0
    %131 = vmatmul.mubr.f32.gmra.mrb[0].mxu0 %v55
    %v132 = vpop.f32.mrb[0].mxu0
    %v133 = vadd.f32 0.0, %v132
    %v134 = vpop.f32.mrb[0].mxu0
    %135 = vdwg.mxu0
    %vm136 = vcmask 261120
    %v137 = vsel %vm136, %v128, -inf
    %v138 = vrot.slane %v137, 4
    %v139 = vmax.f32 %v137, %v138
    %v140 = vrot.slane %v139, 2
    %v141 = vmax.f32 %v139, %v140
    %v142 = vrot.slane %v141, 1
    %v143 = vmax.f32 %v141, %v142
    %v144 = vsel %vm136, %v133, -inf
    %v145 = vrot.slane %v144, 4
    %v146 = vmax.f32 %v144, %v145
    %v147 = vrot.slane %v146, 2
    %v148 = vmax.f32 %v146, %v147
    %v149 = vrot.slane %v148, 1
    %v150 = vmax.f32 %v148, %v149
    %v152 = vlaneseq
    %v153 = vshrl.u32 %v152, 7
    %v154 = vsub.s32 0, %v153
    %v155 = vrot.slane %v35, %v154
    %v157 = vadd.f32 %v143, %v155
    %v158 = vadd.f32 %v150, %v155
    %v161 = vrot.slane %v158, 7
    %vm162 = vcmask 1041409
    %v163 = vsel %vm162, %v161, %v157
    %vm165 = vcmask 254976
    %166 = vst.msk [vmem:[#allocation5] sm:$0x3] %vm165, %v163
    // Predicated region
    $region18: #{_lambda_.1} parent=1 // pred_check
      _
    $region19: #{_lambda_.1} parent=1 // pred_check_branch
      %168 = sbr.rel (0) target = $region21
    $region20: #{_lambda_.1} parent=1 // pred_region
      %s170 = ssub.s32 32, 32
      %171 = vsyncadd [#allocation4], %s170
      %s173 = sshll.u32 [#allocation5], 4
      %s174 = int_to_ptr.vmem [resolvable:$true] %s173
      %176 = dma.vmem_to_hbm [thread:$0]  %s174, 32, %s3, [#allocation4]
    $region21: #{_lambda_.1} parent=1 // pred_fallthru
      _
    // Predicated region
    $region22: #{_lambda_.1} parent=1 // pred_check
      _
    $region23: #{_lambda_.1} parent=1 // pred_check_branch
      %178 = sbr.rel (0) target = $region25
    $region24: #{_lambda_.1} parent=1 // pred_region
      %179 = dma.done [#allocation4], 32
    $region25: #{_lambda_.1} parent=1 // pred_fallthru
      _
    %180 = vsyncpa [#allocation3], 1
    %181 = vsyncpa [#allocation4], 1

</llo_original>
